<compile_context>
chip_gen: v7x
topology: tpu7x:2x2x1
jax: 0.10.0
libtpu: 0.0.40
codegen_flags: <defaults>
</compile_context>

<pallas_src>
import jax
import jax.numpy as jnp
from jax.experimental import pallas as pl
from jax.experimental.pallas import tpu as pltpu


_LANES = 512            # lane-dense last dim (multiple of 128)
_MAX_TILE_ROWS = 1024   # 1024 x 512 f32 = 2 MiB per tile buffer


def _make_snake_kernel(a: float):
    # x + (1/a) * sin(a*x)^2  ==  x + (0.5/a) * (1 - cos(2*a*x))
    two_a = float(2.0 * a)
    half_inv_a = float(0.5 / a)

    def kernel(x_ref, o_ref):
        x = x_ref[...].astype(jnp.float32)
        y = x + half_inv_a * (1.0 - jnp.cos(two_a * x))
        o_ref[...] = y.astype(o_ref.dtype)

    return kernel


def snake(x: jax.Array, a: float = 0.25) -> jax.Array:
    """Snake activation (elementwise) as a tiled, pipelined Pallas TPU kernel."""
    # TODO(synk): per-channel learnable alpha (shape (C,)) would need a
    # channel-aligned layout; the reference module uses a scalar a, handled here.
    orig_shape = x.shape
    dtype = x.dtype
    n = int(x.size)
    if n == 0:
        return x

    # Lane-dense 2-D slab: (rows, _LANES). Reshape of a contiguous buffer is free.
    total_rows = -(-n // _LANES)
    # Tile rows: multiple of 8 (sublanes), capped at _MAX_TILE_ROWS.
    tile_rows = min(_MAX_TILE_ROWS, ((total_rows + 7) // 8) * 8)
    padded_rows = -(-total_rows // tile_rows) * tile_rows
    padded_n = padded_rows * _LANES

    flat = x.reshape(-1)
    if padded_n != n:
        flat = jnp.pad(flat, (0, padded_n - n))
    x2d = flat.reshape(padded_rows, _LANES)

    grid = (padded_rows // tile_rows,)

    out2d = pl.pallas_call(
        _make_snake_kernel(a),
        out_shape=jax.ShapeDtypeStruct((padded_rows, _LANES), dtype),
        grid_spec=pl.GridSpec(
            grid=grid,
            in_specs=[pl.BlockSpec((tile_rows, _LANES), lambda i: (i, 0))],
            out_specs=pl.BlockSpec((tile_rows, _LANES), lambda i: (i, 0)),
        ),
        compiler_params=pltpu.CompilerParams(
            dimension_semantics=("parallel",),
        ),
    )(x2d)

    return out2d.reshape(-1)[:n].reshape(orig_shape)


def snake_ref(x, a=0.25):
    return x + (1.0 / a) * jnp.sin(a * x) ** 2


if __name__ == "__main__":
    key = jax.random.PRNGKey(0)

    # Primary: NCHW input matching the PyTorch module's conv-style tensors.
    x = jax.random.normal(key, (2, 4, 16, 16), dtype=jnp.float32)
    out = jax.block_until_ready(snake(x, a=0.25))
    ref = snake_ref(x, a=0.25)
    assert out.shape == x.shape and out.dtype == x.dtype
    assert jnp.allclose(out, ref, atol=1e-5, rtol=1e-5), "mismatch vs reference (small)"

    # Secondary: exercises multi-step grid + padded tail path.
    k2 = jax.random.split(key)[0]
    x2 = jax.random.normal(k2, (4, 8, 128, 160), dtype=jnp.float32)  # 655360 elems -> grid=(2,)
    out2 = jax.block_until_ready(snake(x2, a=0.25))
    ref2 = snake_ref(x2, a=0.25)
    assert out2.shape == x2.shape and out2.dtype == x2.dtype
    assert jnp.allclose(out2, ref2, atol=1e-5, rtol=1e-5), "mismatch vs reference (tiled)"

    print("KERNEL_OK")
</pallas_src>

<mosaic_0001>
module attributes {stable_mosaic.version = 11 : i64} {
  func.func @kernel(%arg0: i32, %arg1: memref<8x512xf32, #tpu.memory_space<vmem>>, %arg2: memref<8x512xf32, #tpu.memory_space<vmem>>) attributes {dimension_semantics = [#tpu.dimension_semantics<parallel>], iteration_bounds = array<i64: 1>, scalar_prefetch = 0 : i64, scratch_operands = 0 : i64, tpu.core_type = #tpu.core_type<tc>, window_params = [{transform_indices = @transform_0, window_bounds = array<i64: 8, 512>}, {transform_indices = @transform_1, window_bounds = array<i64: 8, 512>}]} {
    %c0 = arith.constant 0 : index
    %c0_0 = arith.constant 0 : index
    %0 = vector.load %arg1[%c0, %c0_0] : memref<8x512xf32, #tpu.memory_space<vmem>>, vector<8x512xf32>
    %cst = arith.constant 5.000000e-01 : f32
    %1 = vector.broadcast %cst : f32 to vector<8x512xf32>
    %2 = arith.mulf %1, %0 : vector<8x512xf32>
    %3 = math.cos %2 : vector<8x512xf32>
    %cst_1 = arith.constant 1.000000e+00 : f32
    %4 = vector.broadcast %cst_1 : f32 to vector<8x512xf32>
    %5 = arith.subf %4, %3 : vector<8x512xf32>
    %cst_2 = arith.constant 2.000000e+00 : f32
    %6 = vector.broadcast %cst_2 : f32 to vector<8x512xf32>
    %7 = arith.mulf %6, %5 : vector<8x512xf32>
    %8 = arith.addf %0, %7 : vector<8x512xf32>
    %c0_3 = arith.constant 0 : index
    %c0_4 = arith.constant 0 : index
    %9 = vector.load %arg2[%c0_3, %c0_4] : memref<8x512xf32, #tpu.memory_space<vmem>>, vector<8x512xf32>
    tpu.vector_store %arg2[%c0_3, %c0_4], %8 {strides = array<i32>} : memref<8x512xf32, #tpu.memory_space<vmem>>, vector<8x512xf32>,
    return
  }
  func.func @transform_0(%arg0: i32) -> (i32, i32) {
    %c0_i32 = arith.constant 0 : i32
    %c0_i32_0 = arith.constant 0 : i32
    return %arg0, %c0_i32 : i32, i32
  }
  func.func @transform_1(%arg0: i32) -> (i32, i32) {
    %c0_i32 = arith.constant 0 : i32
    %c0_i32_0 = arith.constant 0 : i32
    return %arg0, %c0_i32 : i32, i32
  }
}

</mosaic_0001>

<llo_original>
// kernel: tpu_custom_call.1
$region0: #{tpu_custom_call.1}
  #allocation0 [shape = 'u32[]', space=smem, size = 0x4, offset = 0x4, fixed_abs, tag = 'smem constant byte address 0x4 - core index']
  #allocation1 [shape = 'u32[144,128]{1,0:T(1,128)}', space=vmem, size = 0x12000, scoped, tag = 'internal scratch']
  %s0 = inlined_call_operand.hbm [shape: f32[8,512], index: 0, kind: input, shape index: {}]
  %s1 = inlined_call_operand.hbm [shape: f32[8,512], index: 1, kind: output, shape index: {}]
  %s2 = sld [smem:[#allocation0]]
  $region18: #{tpu_custom_call.1} parent=0
    _
  %s4 = ssub.s32 1, %s2
  %s5 = scalar_select 0, %s4, %s2
  $region1: #{tpu_custom_call.1} parent=0
    #allocation2 [shape = 'u8[16384]{0}', space=vmem, size = 0x4000, scoped, tag = 'input window, operand 0, single buffered']
    #allocation3 [shape = 's32[1]{0}', space=sflag, size = 0x4, scoped, tag = 'scoped memory for tpu_custom_call.1']
    #allocation4 [shape = 's32[1]{0}', space=sflag, size = 0x4, scoped, tag = 'scoped memory for tpu_custom_call.1']
    #allocation5 [shape = 'u8[16384]{0}', space=vmem, size = 0x4000, scoped, tag = 'output window, operand 0, single buffered']
    %6 = vsyncpa [#allocation3], 0
    %7 = vsyncpa [#allocation4], 0
    // Predicated region
    $region2: #{tpu_custom_call.1} parent=1 // pred_check
      _
    $region3: #{tpu_custom_call.1} parent=1 // pred_check_branch
      %9 = sbr.rel (0) target = $region5
    $region4: #{tpu_custom_call.1} parent=1 // pred_region
      %s11 = ssub.s32 512, 512
      %12 = vsyncadd [#allocation3], %s11
      %s14 = sshll.u32 [#allocation2], 4
      %s15 = int_to_ptr.vmem [resolvable:$true] %s14
      %17 = dma.hbm_to_vmem [thread:$0]  %s0, 512, %s15, [#allocation3]
    $region5: #{tpu_custom_call.1} parent=1 // pred_fallthru
      _
    // Predicated region
    $region6: #{tpu_custom_call.1} parent=1 // pred_check
      _
    $region7: #{tpu_custom_call.1} parent=1 // pred_check_branch
      %19 = sbr.rel (0) target = $region9
    $region8: #{tpu_custom_call.1} parent=1 // pred_region
      %20 = dma.done [#allocation3], 512
    $region9: #{tpu_custom_call.1} parent=1 // pred_fallthru
      _
    %v21 = vld [vmem:[#allocation2] sm:$0xff]
    %v22 = vld [vmem:[#allocation2 + $0x8] sm:$0xff]
    %v23 = vld [vmem:[#allocation2 + $0x10] sm:$0xff]
    %v24 = vld [vmem:[#allocation2 + $0x18] sm:$0xff]
    %v25 = vmul.f32 %v21, 0.5
    %v26 = vmul.f32 %v22, 0.5
    %v27 = vmul.f32 %v23, 0.5
    %v28 = vmul.f32 %v24, 0.5
    %v29 = vand.u32 2147483647, %v25
    %vm30 = vcmp.le.f32.partialorder %v29, 0.7853982
    %vm31 = vcmp.lt.s32.totalorder %v25, 0
    %v32 = vand.u32 %v25, 2139095040
    %v33 = vshrl.u32 %v32, 23
    %v34 = vsub.s32 %v33, 127
    %v35 = vand.u32 2147483647, %v25
    %v36 = vand.u32 %v35, 8388607
    %v37 = vor.u32 %v36, 8388608
    %v38 = vsub.s32 0, %v37
    %v39 = vadd.s32 %v34, 1
    %vm40 = vcmp.gt.s32.totalorder %v39, 0
    %v41 = vsel %vm40, %v39, 0
    %v42 = vshrl.u32 %v41, 5
    %v43 = vand.u32 %v41, 31
    %v44 = vsub.s32 32, %v43
    %v45 = vshrl.u32 683565275, %v44
    %v46 = vshll.u32 683565275, %v43
    %v47 = vshrl.u32 2475754826, %v44
    %v48 = vor.u32 %v46, %v47
    %v49 = vshll.u32 2475754826, %v43
    %v50 = vshrl.u32 2131351028, %v44
    %v51 = vor.u32 %v49, %v50
    %v52 = vshll.u32 2131351028, %v43
    %v53 = vshrl.u32 2102212464, %v44
    %v54 = vor.u32 %v52, %v53
    %v55 = vshll.u32 2102212464, %v43
    %v56 = vshrl.u32 920167782, %v44
    %v57 = vor.u32 %v55, %v56
    %v58 = vshll.u32 920167782, %v43
    %v59 = vshrl.u32 1326507024, %v44
    %v60 = vor.u32 %v58, %v59
    %vm61 = vcmp.lt.s32.totalorder %v42, 1
    %vm62 = vcmp.lt.s32.totalorder %v42, 2
    %vm63 = vcmp.lt.s32.totalorder %v42, 3
    %vm64 = vcmp.lt.s32.totalorder %v42, 4
    %v65 = vsel %vm61, %v45, %v48
    %v66 = vsel %vm64, %v54, 2102212464
    %v67 = vsel %vm63, %v51, %v66
    %v68 = vsel %vm62, %v65, %v67
    %v69 = vsel %vm61, %v48, %v51
    %v70 = vsel %vm64, %v57, 920167782
    %v71 = vsel %vm63, %v54, %v70
    %v72 = vsel %vm62, %v69, %v71
    %v73 = vsel %vm61, %v51, %v54
    %v74 = vsel %vm64, %v60, 1326507024
    %v75 = vsel %vm63, %v57, %v74
    %v76 = vsel %vm62, %v73, %v75
    %v77 = vshll.u32 %v37, 8
    %v78 = vmul.u32.u64.compose %v77, %v76
    %v79 = vextract.low.u32 %v78
    %v80 = vextract.high.u32 %v78
    %v81 = vmul.u32.u64.compose %v77, %v72
    %v82 = vextract.low.u32 %v81
    %v83 = vextract.high.u32 %v81
    %v84 = vmul.u32 %v77, %v68
    %v85 = vadd.s32 %v80, %v82
    %vm86 = vc.u32 %v80, %v82
    %v87 = vadd.s32 %v83, 1
    %v88 = vsel %vm86, %v87, %v83
    %v89 = vadd.s32 %v84, %v88
    %v90 = vadd.s32 %v89, 536870912
    %v91 = vshrl.u32 %v90, 30
    %v92 = vshll.u32 %v91, 30
    %v93 = vsub.s32 %v89, %v92
    %vm94 = vcmp.lt.s32.totalorder %v93, 0
    %v95 = vsub.s32 0, %v93
    %v96 = vsel %vm94, %v95, %v93
    %v97 = vclz %v96
    %v98 = vsub.s32 %v97, 2
    %vm99 = vcmp.gt.s32.totalorder 0, %v98
    %v100 = vsel %vm99, 0, %v98
    %v101 = vsub.s32 32, %v100
    %v102 = vshll.u32 %v93, %v100
    %v103 = vshrl.u32 %v85, %v101
    %v104 = vor.u32 %v102, %v103
    %v105 = vsub.s32 4294967266, %v100
    %v106 = vadd.s32 %v105, 127
    %v107 = vshll.u32 %v106, 23
    %v108 = vor.u32 4788187, %v107
    %v109 = vand.u32 2147483647, %v108
    %v111 = vcvt.s32.f32 %v104
    %v112 = vmul.f32 %v111, %v109
    %v113 = vxor.u32 %v112, 2147483648
    %v114 = vsel %vm31, %v113, %v112
    %v115 = vsub.s32 4, %v91
    %v116 = vsel %vm31, %v115, %v91
    %v117 = vsel %vm30, %v25, %v114
    %v118 = vsel %vm30, 0, %v116
    %v119 = vcosq.f32.pop %v117
    %v120 = vsinq.f32.pop %v117
    %vm121 = vweird.f32 %v25
    %v122 = vand.u32 %v118, 3
    %vm123 = vcmp.lt.s32.totalorder %v122, 2
    %vm124 = vcmp.eq.s32.totalorder %v122, 0
    %v125 = vxor.u32 %v120, 2147483648
    %v126 = vsel %vm124, %v119, %v125
    %vm127 = vcmp.eq.s32.totalorder %v122, 2
    %v128 = vxor.u32 %v119, 2147483648
    %v129 = vsel %vm127, %v128, %v120
    %v130 = vsel %vm123, %v126, %v129
    %v131 = vsel %vm121, nan, %v130
    %v132 = vand.u32 2147483647, %v26
    %vm133 = vcmp.le.f32.partialorder %v132, 0.7853982
    %vm134 = vcmp.lt.s32.totalorder %v26, 0
    %v135 = vand.u32 %v26, 2139095040
    %v136 = vshrl.u32 %v135, 23
    %v137 = vsub.s32 %v136, 127
    %v138 = vand.u32 2147483647, %v26
    %v139 = vand.u32 %v138, 8388607
    %v140 = vor.u32 %v139, 8388608
    %v141 = vsub.s32 0, %v140
    %v142 = vadd.s32 %v137, 1
    %vm143 = vcmp.gt.s32.totalorder %v142, 0
    %v144 = vsel %vm143, %v142, 0
    %v145 = vshrl.u32 %v144, 5
    %v146 = vand.u32 %v144, 31
    %v147 = vsub.s32 32, %v146
    %v148 = vshrl.u32 683565275, %v147
    %v149 = vshll.u32 683565275, %v146
    %v150 = vshrl.u32 2475754826, %v147
    %v151 = vor.u32 %v149, %v150
    %v152 = vshll.u32 2475754826, %v146
    %v153 = vshrl.u32 2131351028, %v147
    %v154 = vor.u32 %v152, %v153
    %v155 = vshll.u32 2131351028, %v146
    %v156 = vshrl.u32 2102212464, %v147
    %v157 = vor.u32 %v155, %v156
    %v158 = vshll.u32 2102212464, %v146
    %v159 = vshrl.u32 920167782, %v147
    %v160 = vor.u32 %v158, %v159
    %v161 = vshll.u32 920167782, %v146
    %v162 = vshrl.u32 1326507024, %v147
    %v163 = vor.u32 %v161, %v162
    %vm164 = vcmp.lt.s32.totalorder %v145, 1
    %vm165 = vcmp.lt.s32.totalorder %v145, 2
    %vm166 = vcmp.lt.s32.totalorder %v145, 3
    %vm167 = vcmp.lt.s32.totalorder %v145, 4
    %v168 = vsel %vm164, %v148, %v151
    %v169 = vsel %vm167, %v157, 2102212464
    %v170 = vsel %vm166, %v154, %v169
    %v171 = vsel %vm165, %v168, %v170
    %v172 = vsel %vm164, %v151, %v154
    %v173 = vsel %vm167, %v160, 920167782
    %v174 = vsel %vm166, %v157, %v173
    %v175 = vsel %vm165, %v172, %v174
    %v176 = vsel %vm164, %v154, %v157
    %v177 = vsel %vm167, %v163, 1326507024
    %v178 = vsel %vm166, %v160, %v177
    %v179 = vsel %vm165, %v176, %v178
    %v180 = vshll.u32 %v140, 8
    %v181 = vmul.u32.u64.compose %v180, %v179
    %v182 = vextract.low.u32 %v181
    %v183 = vextract.high.u32 %v181
    %v184 = vmul.u32.u64.compose %v180, %v175
    %v185 = vextract.low.u32 %v184
    %v186 = vextract.high.u32 %v184
    %v187 = vmul.u32 %v180, %v171
    %v188 = vadd.s32 %v183, %v185
    %vm189 = vc.u32 %v183, %v185
    %v190 = vadd.s32 %v186, 1
    %v191 = vsel %vm189, %v190, %v186
    %v192 = vadd.s32 %v187, %v191
    %v193 = vadd.s32 %v192, 536870912
    %v194 = vshrl.u32 %v193, 30
    %v195 = vshll.u32 %v194, 30
    %v196 = vsub.s32 %v192, %v195
    %vm197 = vcmp.lt.s32.totalorder %v196, 0
    %v198 = vsub.s32 0, %v196
    %v199 = vsel %vm197, %v198, %v196
    %v200 = vclz %v199
    %v201 = vsub.s32 %v200, 2
    %vm202 = vcmp.gt.s32.totalorder 0, %v201
    %v203 = vsel %vm202, 0, %v201
    %v204 = vsub.s32 32, %v203
    %v205 = vshll.u32 %v196, %v203
    %v206 = vshrl.u32 %v188, %v204
    %v207 = vor.u32 %v205, %v206
    %v208 = vsub.s32 4294967266, %v203
    %v209 = vadd.s32 %v208, 127
    %v210 = vshll.u32 %v209, 23
    %v211 = vor.u32 4788187, %v210
    %v212 = vand.u32 2147483647, %v211
    %v214 = vcvt.s32.f32 %v207
    %v215 = vmul.f32 %v214, %v212
    %v216 = vxor.u32 %v215, 2147483648
    %v217 = vsel %vm134, %v216, %v215
    %v218 = vsub.s32 4, %v194
    %v219 = vsel %vm134, %v218, %v194
    %v220 = vsel %vm133, %v26, %v217
    %v221 = vsel %vm133, 0, %v219
    %v222 = vcosq.f32.pop %v220
    %v223 = vsinq.f32.pop %v220
    %vm224 = vweird.f32 %v26
    %v225 = vand.u32 %v221, 3
    %vm226 = vcmp.lt.s32.totalorder %v225, 2
    %vm227 = vcmp.eq.s32.totalorder %v225, 0
    %v228 = vxor.u32 %v223, 2147483648
    %v229 = vsel %vm227, %v222, %v228
    %vm230 = vcmp.eq.s32.totalorder %v225, 2
    %v231 = vxor.u32 %v222, 2147483648
    %v232 = vsel %vm230, %v231, %v223
    %v233 = vsel %vm226, %v229, %v232
    %v234 = vsel %vm224, nan, %v233
    %v235 = vand.u32 2147483647, %v27
    %vm236 = vcmp.le.f32.partialorder %v235, 0.7853982
    %vm237 = vcmp.lt.s32.totalorder %v27, 0
    %v238 = vand.u32 %v27, 2139095040
    %v239 = vshrl.u32 %v238, 23
    %v240 = vsub.s32 %v239, 127
    %v241 = vand.u32 2147483647, %v27
    %v242 = vand.u32 %v241, 8388607
    %v243 = vor.u32 %v242, 8388608
    %v244 = vsub.s32 0, %v243
    %v245 = vadd.s32 %v240, 1
    %vm246 = vcmp.gt.s32.totalorder %v245, 0
    %v247 = vsel %vm246, %v245, 0
    %v248 = vshrl.u32 %v247, 5
    %v249 = vand.u32 %v247, 31
    %v250 = vsub.s32 32, %v249
    %v251 = vshrl.u32 683565275, %v250
    %v252 = vshll.u32 683565275, %v249
    %v253 = vshrl.u32 2475754826, %v250
    %v254 = vor.u32 %v252, %v253
    %v255 = vshll.u32 2475754826, %v249
    %v256 = vshrl.u32 2131351028, %v250
    %v257 = vor.u32 %v255, %v256
    %v258 = vshll.u32 2131351028, %v249
    %v259 = vshrl.u32 2102212464, %v250
    %v260 = vor.u32 %v258, %v259
    %v261 = vshll.u32 2102212464, %v249
    %v262 = vshrl.u32 920167782, %v250
    %v263 = vor.u32 %v261, %v262
    %v264 = vshll.u32 920167782, %v249
    %v265 = vshrl.u32 1326507024, %v250
    %v266 = vor.u32 %v264, %v265
    %vm267 = vcmp.lt.s32.totalorder %v248, 1
    %vm268 = vcmp.lt.s32.totalorder %v248, 2
    %vm269 = vcmp.lt.s32.totalorder %v248, 3
    %vm270 = vcmp.lt.s32.totalorder %v248, 4
    %v271 = vsel %vm267, %v251, %v254
    %v272 = vsel %vm270, %v260, 2102212464
    %v273 = vsel %vm269, %v257, %v272
    %v274 = vsel %vm268, %v271, %v273
    %v275 = vsel %vm267, %v254, %v257
    %v276 = vsel %vm270, %v263, 920167782
    %v277 = vsel %vm269, %v260, %v276
    %v278 = vsel %vm268, %v275, %v277
    %v279 = vsel %vm267, %v257, %v260
    %v280 = vsel %vm270, %v266, 1326507024
    %v281 = vsel %vm269, %v263, %v280
    %v282 = vsel %vm268, %v279, %v281
    %v283 = vshll.u32 %v243, 8
    %v284 = vmul.u32.u64.compose %v283, %v282
    %v285 = vextract.low.u32 %v284
    %v286 = vextract.high.u32 %v284
    %v287 = vmul.u32.u64.compose %v283, %v278
    %v288 = vextract.low.u32 %v287
    %v289 = vextract.high.u32 %v287
    %v290 = vmul.u32 %v283, %v274
    %v291 = vadd.s32 %v286, %v288
    %vm292 = vc.u32 %v286, %v288
    %v293 = vadd.s32 %v289, 1
    %v294 = vsel %vm292, %v293, %v289
    %v295 = vadd.s32 %v290, %v294
    %v296 = vadd.s32 %v295, 536870912
    %v297 = vshrl.u32 %v296, 30
    %v298 = vshll.u32 %v297, 30
    %v299 = vsub.s32 %v295, %v298
    %vm300 = vcmp.lt.s32.totalorder %v299, 0
    %v301 = vsub.s32 0, %v299
    %v302 = vsel %vm300, %v301, %v299
    %v303 = vclz %v302
    %v304 = vsub.s32 %v303, 2
    %vm305 = vcmp.gt.s32.totalorder 0, %v304
    %v306 = vsel %vm305, 0, %v304
    %v307 = vsub.s32 32, %v306
    %v308 = vshll.u32 %v299, %v306
    %v309 = vshrl.u32 %v291, %v307
    %v310 = vor.u32 %v308, %v309
    %v311 = vsub.s32 4294967266, %v306
    %v312 = vadd.s32 %v311, 127
    %v313 = vshll.u32 %v312, 23
    %v314 = vor.u32 4788187, %v313
    %v315 = vand.u32 2147483647, %v314
    %v317 = vcvt.s32.f32 %v310
    %v318 = vmul.f32 %v317, %v315
    %v319 = vxor.u32 %v318, 2147483648
    %v320 = vsel %vm237, %v319, %v318
    %v321 = vsub.s32 4, %v297
    %v322 = vsel %vm237, %v321, %v297
    %v323 = vsel %vm236, %v27, %v320
    %v324 = vsel %vm236, 0, %v322
    %v325 = vcosq.f32.pop %v323
    %v326 = vsinq.f32.pop %v323
    %vm327 = vweird.f32 %v27
    %v328 = vand.u32 %v324, 3
    %vm329 = vcmp.lt.s32.totalorder %v328, 2
    %vm330 = vcmp.eq.s32.totalorder %v328, 0
    %v331 = vxor.u32 %v326, 2147483648
    %v332 = vsel %vm330, %v325, %v331
    %vm333 = vcmp.eq.s32.totalorder %v328, 2
    %v334 = vxor.u32 %v325, 2147483648
    %v335 = vsel %vm333, %v334, %v326
    %v336 = vsel %vm329, %v332, %v335
    %v337 = vsel %vm327, nan, %v336
    %v338 = vand.u32 2147483647, %v28
    %vm339 = vcmp.le.f32.partialorder %v338, 0.7853982
    %vm340 = vcmp.lt.s32.totalorder %v28, 0
    %v341 = vand.u32 %v28, 2139095040
    %v342 = vshrl.u32 %v341, 23
    %v343 = vsub.s32 %v342, 127
    %v344 = vand.u32 2147483647, %v28
    %v345 = vand.u32 %v344, 8388607
    %v346 = vor.u32 %v345, 8388608
    %v347 = vsub.s32 0, %v346
    %v348 = vadd.s32 %v343, 1
    %vm349 = vcmp.gt.s32.totalorder %v348, 0
    %v350 = vsel %vm349, %v348, 0
    %v351 = vshrl.u32 %v350, 5
    %v352 = vand.u32 %v350, 31
    %v353 = vsub.s32 32, %v352
    %v354 = vshrl.u32 683565275, %v353
    %v355 = vshll.u32 683565275, %v352
    %v356 = vshrl.u32 2475754826, %v353
    %v357 = vor.u32 %v355, %v356
    %v358 = vshll.u32 2475754826, %v352
    %v359 = vshrl.u32 2131351028, %v353
    %v360 = vor.u32 %v358, %v359
    %v361 = vshll.u32 2131351028, %v352
    %v362 = vshrl.u32 2102212464, %v353
    %v363 = vor.u32 %v361, %v362
    %v364 = vshll.u32 2102212464, %v352
    %v365 = vshrl.u32 920167782, %v353
    %v366 = vor.u32 %v364, %v365
    %v367 = vshll.u32 920167782, %v352
    %v368 = vshrl.u32 1326507024, %v353
    %v369 = vor.u32 %v367, %v368
    %vm370 = vcmp.lt.s32.totalorder %v351, 1
    %vm371 = vcmp.lt.s32.totalorder %v351, 2
    %vm372 = vcmp.lt.s32.totalorder %v351, 3
    %vm373 = vcmp.lt.s32.totalorder %v351, 4
    %v374 = vsel %vm370, %v354, %v357
    %v375 = vsel %vm373, %v363, 2102212464
    %v376 = vsel %vm372, %v360, %v375
    %v377 = vsel %vm371, %v374, %v376
    %v378 = vsel %vm370, %v357, %v360
    %v379 = vsel %vm373, %v366, 920167782
    %v380 = vsel %vm372, %v363, %v379
    %v381 = vsel %vm371, %v378, %v380
    %v382 = vsel %vm370, %v360, %v363
    %v383 = vsel %vm373, %v369, 1326507024
    %v384 = vsel %vm372, %v366, %v383
    %v385 = vsel %vm371, %v382, %v384
    %v386 = vshll.u32 %v346, 8
    %v387 = vmul.u32.u64.compose %v386, %v385
    %v388 = vextract.low.u32 %v387
    %v389 = vextract.high.u32 %v387
    %v390 = vmul.u32.u64.compose %v386, %v381
    %v391 = vextract.low.u32 %v390
    %v392 = vextract.high.u32 %v390
    %v393 = vmul.u32 %v386, %v377
    %v394 = vadd.s32 %v389, %v391
    %vm395 = vc.u32 %v389, %v391
    %v396 = vadd.s32 %v392, 1
    %v397 = vsel %vm395, %v396, %v392
    %v398 = vadd.s32 %v393, %v397
    %v399 = vadd.s32 %v398, 536870912
    %v400 = vshrl.u32 %v399, 30
    %v401 = vshll.u32 %v400, 30
    %v402 = vsub.s32 %v398, %v401
    %vm403 = vcmp.lt.s32.totalorder %v402, 0
    %v404 = vsub.s32 0, %v402
    %v405 = vsel %vm403, %v404, %v402
    %v406 = vclz %v405
    %v407 = vsub.s32 %v406, 2
    %vm408 = vcmp.gt.s32.totalorder 0, %v407
    %v409 = vsel %vm408, 0, %v407
    %v410 = vsub.s32 32, %v409
    %v411 = vshll.u32 %v402, %v409
    %v412 = vshrl.u32 %v394, %v410
    %v413 = vor.u32 %v411, %v412
    %v414 = vsub.s32 4294967266, %v409
    %v415 = vadd.s32 %v414, 127
    %v416 = vshll.u32 %v415, 23
    %v417 = vor.u32 4788187, %v416
    %v418 = vand.u32 2147483647, %v417
    %v420 = vcvt.s32.f32 %v413
    %v421 = vmul.f32 %v420, %v418
    %v422 = vxor.u32 %v421, 2147483648
    %v423 = vsel %vm340, %v422, %v421
    %v424 = vsub.s32 4, %v400
    %v425 = vsel %vm340, %v424, %v400
    %v426 = vsel %vm339, %v28, %v423
    %v427 = vsel %vm339, 0, %v425
    %v428 = vcosq.f32.pop %v426
    %v429 = vsinq.f32.pop %v426
    %vm430 = vweird.f32 %v28
    %v431 = vand.u32 %v427, 3
    %vm432 = vcmp.lt.s32.totalorder %v431, 2
    %vm433 = vcmp.eq.s32.totalorder %v431, 0
    %v434 = vxor.u32 %v429, 2147483648
    %v435 = vsel %vm433, %v428, %v434
    %vm436 = vcmp.eq.s32.totalorder %v431, 2
    %v437 = vxor.u32 %v428, 2147483648
    %v438 = vsel %vm436, %v437, %v429
    %v439 = vsel %vm432, %v435, %v438
    %v440 = vsel %vm430, nan, %v439
    %v441 = vsub.f32 1.0, %v131
    %v442 = vsub.f32 1.0, %v234
    %v443 = vsub.f32 1.0, %v337
    %v444 = vsub.f32 1.0, %v440
    %v445 = vmul.f32 %v441, 2.0
    %v446 = vmul.f32 %v442, 2.0
    %v447 = vmul.f32 %v443, 2.0
    %v448 = vmul.f32 %v444, 2.0
    %v449 = vadd.f32 %v21, %v445
    %v450 = vadd.f32 %v22, %v446
    %v451 = vadd.f32 %v23, %v447
    %v452 = vadd.f32 %v24, %v448
    %453 = vst [vmem:[#allocation5] sm:$0xff] %v449
    %454 = vst [vmem:[#allocation5 + $0x8] sm:$0xff] %v450
    %455 = vst [vmem:[#allocation5 + $0x10] sm:$0xff] %v451
    %456 = vst [vmem:[#allocation5 + $0x18] sm:$0xff] %v452
    // Predicated region
    $region10: #{tpu_custom_call.1} parent=1 // pred_check
      _
    $region11: #{tpu_custom_call.1} parent=1 // pred_check_branch
      %458 = sbr.rel (0) target = $region13
    $region12: #{tpu_custom_call.1} parent=1 // pred_region
      %s460 = ssub.s32 512, 512
      %461 = vsyncadd [#allocation4], %s460
      %s463 = sshll.u32 [#allocation5], 4
      %s464 = int_to_ptr.vmem [resolvable:$true] %s463
      %466 = dma.vmem_to_hbm [thread:$0]  %s464, 512, %s1, [#allocation4]
    $region13: #{tpu_custom_call.1} parent=1 // pred_fallthru
      _
    // Predicated region
    $region14: #{tpu_custom_call.1} parent=1 // pred_check
      _
    $region15: #{tpu_custom_call.1} parent=1 // pred_check_branch
      %468 = sbr.rel (0) target = $region17
    $region16: #{tpu_custom_call.1} parent=1 // pred_region
      %469 = dma.done [#allocation4], 512
    $region17: #{tpu_custom_call.1} parent=1 // pred_fallthru
      _
    %470 = vsyncpa [#allocation3], 1
    %471 = vsyncpa [#allocation4], 1

</llo_original>
